<compile_context>
chip_gen: v7x
topology: tpu7x:2x2x1
jax: 0.10.0
libtpu: 0.0.40
codegen_flags: <defaults>
</compile_context>

<pallas_src>
import functools

import jax
import jax.numpy as jnp
from jax.experimental import pallas as pl
from jax.experimental.pallas import tpu as pltpu


def _fused_conv_bn_relu_kernel(x_ref, w_ref, scale_ref, shift_ref, o_ref):
    # x_ref:     (C_in, thw)   activation tile (spatial / N*spatial on lanes)
    # w_ref:     (tco, C_in)   conv weight tile (activation dtype)
    # scale_ref: (tco, 1)      f32 BN scale = gamma / sqrt(var + eps)
    # shift_ref: (tco, 1)      f32 BN shift = beta - mean * scale
    # o_ref:     (tco, thw)    output tile (lane-dense)
    acc = jnp.dot(w_ref[...], x_ref[...], preferred_element_type=jnp.float32)
    y = acc * scale_ref[...] + shift_ref[...]
    o_ref[...] = jnp.maximum(y, 0.0).astype(o_ref.dtype)


def _vmem_capacity_bytes():
    """Best-effort per-core VMEM capacity (bytes); conservative fallback."""
    try:
        return int(pltpu.get_tpu_info().vmem_capacity_bytes)
    except Exception:
        pass
    try:
        kind = jax.devices()[0].device_kind.lower()
        if "v7" in kind:
            return 64 * 1024 * 1024
        return 128 * 1024 * 1024
    except Exception:
        return 64 * 1024 * 1024


def _select_tiles(c_in, c_out, lane_len, itemsize, vmem_bytes):
    """Pick (tco, thw, vmem_limit): C_out tile, lane tile, compiler VMEM limit."""
    big_vmem = vmem_bytes >= 100 * 1024 * 1024          # v5e / v6e (128 MiB)
    budget = (48 if big_vmem else 22) * 1024 * 1024     # v7x: 64 MiB physical
    cap = 8192 if big_vmem else 4096
    vmem_limit = (100 if big_vmem else 48) * 1024 * 1024

    tco = c_out if c_out <= 512 else 256                 # 256-aligned for MXU
    lane_w = 128 * pl.cdiv(lane_len, 128)                # smallest 128-mult >= L
    thw = min(cap, lane_w)
    while thw > 128:
        need = (2 * (c_in + tco) * thw * itemsize               # dbl-buf x + out
                + 2 * (tco * c_in * itemsize + 2 * tco * 4)     # w + scale/shift
                + tco * thw * 4)                                 # f32 intermediate
        if need <= budget:
            break
        thw = max(128, thw - 256)                        # 256-step (MXU-friendly)
    if thw >= lane_len:
        thw = lane_len                                    # full-dim block: always legal
    return tco, thw, vmem_limit


@functools.partial(jax.jit, static_argnames=("eps",))
def basic_conv2d(x_nchw, weight, gamma, beta, running_mean, running_var,
                 eps=1e-3):
    """x_nchw: (N, C_in, H, W). weight: (C_out, C_in[, 1, 1]) from Conv2d(k=1, bias=False)."""
    N, C_in, H, W = x_nchw.shape
    C_out = weight.shape[0]
    HW = H * W

    # Small-spatial stages: fold the batch into the lane axis (one cheap
    # transpose) so output stores stay lane-dense; otherwise a free reshape.
    fold_n = (HW < 128) and (N > 1)
    if fold_n:
        x3 = jnp.transpose(x_nchw.reshape(N, C_in, HW), (1, 0, 2)).reshape(
            1, C_in, N * HW)
    else:
        x3 = x_nchw.reshape(N, C_in, HW)
    B, _, L = x3.shape
    itemsize = jnp.dtype(x3.dtype).itemsize

    # BatchNorm (inference / running stats) as per-channel f32 scale + shift,
    # applied in the f32 epilogue (no pre-scaling of a possibly-bf16 weight).
    scale_v = gamma.astype(jnp.float32) / jnp.sqrt(
        running_var.astype(jnp.float32) + eps)
    shift_v = beta.astype(jnp.float32) - running_mean.astype(jnp.float32) * scale_v
    scale = scale_v.reshape(C_out, 1)
    shift = shift_v.reshape(C_out, 1)
    w = weight.reshape(C_out, C_in).astype(x3.dtype)

    tco, thw, vmem_limit = _select_tiles(C_in, C_out, L, itemsize,
                                         _vmem_capacity_bytes())
    n_co = pl.cdiv(C_out, tco)
    n_s = pl.cdiv(L, thw)

    cost = pl.CostEstimate(
        flops=2 * B * L * C_in * C_out,
        transcendentals=0,
        bytes_accessed=(B * C_in * L * itemsize                      # x once
                        + B * n_s * (C_out * C_in * itemsize         # w re-reads
                                     + 2 * C_out * 4)                # scale/shift
                        + B * C_out * L * itemsize),                 # output
    )

    # TODO(synk): for very small thw with exposed DMA latency, consider
    # pipeline_mode=pl.Buffered(3) on the x BlockSpec.
    out3 = pl.pallas_call(
        _fused_conv_bn_relu_kernel,
        out_shape=jax.ShapeDtypeStruct((B, C_out, L), x3.dtype),
        grid_spec=pltpu.PrefetchScalarGridSpec(
            num_scalar_prefetch=0,
            # co innermost: the activation tile's block index is constant over
            # the inner axis, so x stays resident in VMEM and is read from HBM
            # exactly once; only the small (tco, C_in) weight tile cycles.
            grid=(B, n_s, n_co),
            in_specs=[
                pl.BlockSpec((None, C_in, thw), lambda n, s, co: (n, 0, s)),
                pl.BlockSpec((tco, C_in), lambda n, s, co: (co, 0)),
                pl.BlockSpec((tco, 1), lambda n, s, co: (co, 0)),
                pl.BlockSpec((tco, 1), lambda n, s, co: (co, 0)),
            ],
            out_specs=pl.BlockSpec((None, tco, thw),
                                   lambda n, s, co: (n, co, s)),
        ),
        compiler_params=pltpu.CompilerParams(
            dimension_semantics=("parallel", "parallel", "parallel"),
            vmem_limit_bytes=vmem_limit,
        ),
        cost_estimate=cost,
    )(x3, w, scale, shift)

    if fold_n:
        out = (out3.reshape(C_out, N, HW).transpose(1, 0, 2)
               .reshape(N, C_out, H, W))
    else:
        out = out3.reshape(N, C_out, H, W)
    return out


def _reference(x_nchw, weight, gamma, beta, running_mean, running_var, eps=1e-3):
    # Pure-JAX reference: 1x1 conv == einsum over channels, then BN + ReLU.
    C_out = weight.shape[0]
    C_in = x_nchw.shape[1]
    w2 = weight.reshape(C_out, C_in)
    y = jnp.einsum("nchw,oc->nohw", x_nchw, w2)
    scale = gamma / jnp.sqrt(running_var + eps)
    shift = beta - running_mean * scale
    y = y * scale[None, :, None, None] + shift[None, :, None, None]
    return jnp.maximum(y, 0.0)


if __name__ == "__main__":
    key = jax.random.PRNGKey(0)
    k_x, k_w, k_g, k_b, k_m, k_v, k_x2, k_w2 = jax.random.split(key, 8)

    # --- Main shape: N=2, C_in=4, 16x16 spatial, C_out=8 (lane-dense path) ---
    N, C_in, H, W = 2, 4, 16, 16
    C_out = 8
    x = jax.random.normal(k_x, (N, C_in, H, W), dtype=jnp.float32)
    weight = jax.random.normal(k_w, (C_out, C_in), dtype=jnp.float32) * 0.1
    gamma = 1.0 + 0.1 * jax.random.normal(k_g, (C_out,), dtype=jnp.float32)
    beta = 0.1 * jax.random.normal(k_b, (C_out,), dtype=jnp.float32)
    running_mean = 0.05 * jax.random.normal(k_m, (C_out,), dtype=jnp.float32)
    running_var = jnp.abs(
        1.0 + 0.1 * jax.random.normal(k_v, (C_out,), dtype=jnp.float32))

    out = jax.block_until_ready(
        basic_conv2d(x, weight, gamma, beta, running_mean, running_var))
    ref = _reference(x, weight, gamma, beta, running_mean, running_var)
    assert out.shape == (N, C_out, H, W), out.shape
    assert jnp.allclose(out, ref, atol=1e-5, rtol=1e-5), \
        float(jnp.max(jnp.abs(out - ref)))

    # --- Small-spatial shape (7x7): exercises the fold-N-into-lanes path ---
    N2, C_in2, H2, W2, C_out2 = 2, 8, 7, 7, 16
    x2 = jax.random.normal(k_x2, (N2, C_in2, H2, W2), dtype=jnp.float32)
    w2 = jax.random.normal(k_w2, (C_out2, C_in2), dtype=jnp.float32) * 0.1
    g2 = jnp.ones((C_out2,), jnp.float32)
    b2 = jnp.zeros((C_out2,), jnp.float32)
    m2 = jnp.zeros((C_out2,), jnp.float32)
    v2 = jnp.ones((C_out2,), jnp.float32)

    out2 = jax.block_until_ready(basic_conv2d(x2, w2, g2, b2, m2, v2))
    ref2 = _reference(x2, w2, g2, b2, m2, v2)
    assert out2.shape == (N2, C_out2, H2, W2), out2.shape
    assert jnp.allclose(out2, ref2, atol=1e-5, rtol=1e-5), \
        float(jnp.max(jnp.abs(out2 - ref2)))

    print("KERNEL_OK")
</pallas_src>

<mosaic_0001>
module attributes {stable_mosaic.version = 11 : i64} {
  func.func @_fused_conv_bn_relu_kernel(%arg0: i32, %arg1: i32, %arg2: i32, %arg3: memref<1x4x256xf32, #tpu.memory_space<vmem>>, %arg4: memref<8x4xf32, #tpu.memory_space<vmem>>, %arg5: memref<8x1xf32, #tpu.memory_space<vmem>>, %arg6: memref<8x1xf32, #tpu.memory_space<vmem>>, %arg7: memref<1x8x256xf32, #tpu.memory_space<vmem>>) attributes {dimension_semantics = [#tpu.dimension_semantics<parallel>, #tpu.dimension_semantics<parallel>, #tpu.dimension_semantics<parallel>], iteration_bounds = array<i64: 2, 1, 1>, scalar_prefetch = 0 : i64, scratch_operands = 0 : i64, tpu.core_type = #tpu.core_type<tc>, window_params = [{transform_indices = @transform_0, window_bounds = array<i64: 1, 4, 256>}, {transform_indices = @transform_1, window_bounds = array<i64: 8, 4>}, {transform_indices = @transform_2, window_bounds = array<i64: 8, 1>}, {transform_indices = @transform_3, window_bounds = array<i64: 8, 1>}, {transform_indices = @transform_4, window_bounds = array<i64: 1, 8, 256>}]} {
    %c0 = arith.constant 0 : index
    %c0_0 = arith.constant 0 : index
    %0 = vector.load %arg4[%c0, %c0_0] : memref<8x4xf32, #tpu.memory_space<vmem>>, vector<8x4xf32>
    %c0_1 = arith.constant 0 : index
    %c0_2 = arith.constant 0 : index
    %c0_3 = arith.constant 0 : index
    %1 = vector.load %arg3[%c0_1, %c0_2, %c0_3] : memref<1x4x256xf32, #tpu.memory_space<vmem>>, vector<1x4x256xf32>
    %2 = vector.shape_cast %1 : vector<1x4x256xf32> to vector<4x256xf32>
    %cst = arith.constant dense<0.000000e+00> : vector<8x256xf32>
    %3 = tpu.matmul %0, %2, %cst {dimension_numbers = #tpu.dot_dimension_numbers<[1], [0], [0], [1], [0, 0, 1, 1], [], []>} : vector<8x4xf32>, vector<4x256xf32>, vector<8x256xf32> -> vector<8x256xf32>
    %c0_4 = arith.constant 0 : index
    %c0_5 = arith.constant 0 : index
    %4 = vector.load %arg5[%c0_4, %c0_5] : memref<8x1xf32, #tpu.memory_space<vmem>>, vector<8x1xf32>
    %5 = vector.broadcast %4 : vector<8x1xf32> to vector<8x256xf32>
    %6 = arith.mulf %3, %5 : vector<8x256xf32>
    %c0_6 = arith.constant 0 : index
    %c0_7 = arith.constant 0 : index
    %7 = vector.load %arg6[%c0_6, %c0_7] : memref<8x1xf32, #tpu.memory_space<vmem>>, vector<8x1xf32>
    %8 = vector.broadcast %7 : vector<8x1xf32> to vector<8x256xf32>
    %9 = arith.addf %6, %8 : vector<8x256xf32>
    %cst_8 = arith.constant 0.000000e+00 : f32
    %10 = vector.broadcast %cst_8 : f32 to vector<8x256xf32>
    %11 = arith.maximumf %9, %10 : vector<8x256xf32>
    %c0_9 = arith.constant 0 : index
    %c0_10 = arith.constant 0 : index
    %c0_11 = arith.constant 0 : index
    %12 = vector.load %arg7[%c0_9, %c0_10, %c0_11] : memref<1x8x256xf32, #tpu.memory_space<vmem>>, vector<1x8x256xf32>
    %13 = vector.shape_cast %12 : vector<1x8x256xf32> to vector<8x256xf32>
    %14 = vector.shape_cast %11 : vector<8x256xf32> to vector<1x8x256xf32>
    tpu.vector_store %arg7[%c0_9, %c0_10, %c0_11], %14 {strides = array<i32>} : memref<1x8x256xf32, #tpu.memory_space<vmem>>, vector<1x8x256xf32>,
    return
  }
  func.func @transform_0(%arg0: i32, %arg1: i32, %arg2: i32) -> (i32, i32, i32) {
    %c0_i32 = arith.constant 0 : i32
    %c0_i32_0 = arith.constant 0 : i32
    return %arg0, %c0_i32, %arg1 : i32, i32, i32
  }
  func.func @transform_1(%arg0: i32, %arg1: i32, %arg2: i32) -> (i32, i32) {
    %c0_i32 = arith.constant 0 : i32
    %c0_i32_0 = arith.constant 0 : i32
    return %arg2, %c0_i32 : i32, i32
  }
  func.func @transform_2(%arg0: i32, %arg1: i32, %arg2: i32) -> (i32, i32) {
    %c0_i32 = arith.constant 0 : i32
    %c0_i32_0 = arith.constant 0 : i32
    return %arg2, %c0_i32 : i32, i32
  }
  func.func @transform_3(%arg0: i32, %arg1: i32, %arg2: i32) -> (i32, i32) {
    %c0_i32 = arith.constant 0 : i32
    %c0_i32_0 = arith.constant 0 : i32
    return %arg2, %c0_i32 : i32, i32
  }
  func.func @transform_4(%arg0: i32, %arg1: i32, %arg2: i32) -> (i32, i32, i32) {
    %c0_i32 = arith.constant 0 : i32
    return %arg0, %arg2, %arg1 : i32, i32, i32
  }
}

</mosaic_0001>

<llo_original>
// kernel: basic_conv2d.1
$region0: #{basic_conv2d.1}
  #allocation0 [shape = 'u32[]', space=smem, size = 0x4, offset = 0x4, fixed_abs, tag = 'smem constant byte address 0x4 - core index']
  #allocation1 [shape = 'u32[144,128]{1,0:T(1,128)}', space=vmem, size = 0x12000, scoped, tag = 'internal scratch']
  %s0 = inlined_call_operand.hbm [shape: f32[2,4,256], index: 0, kind: input, shape index: {}]
  %s1 = inlined_call_operand.hbm [shape: f32[8,4], index: 1, kind: input, shape index: {}]
  %s2 = inlined_call_operand.hbm [shape: f32[8,1], index: 2, kind: input, shape index: {}]
  %s3 = inlined_call_operand.hbm [shape: f32[8,1], index: 3, kind: input, shape index: {}]
  %s4 = inlined_call_operand.hbm [shape: f32[2,8,256], index: 4, kind: output, shape index: {}]
  %s5 = sld [smem:[#allocation0]]
  $region65: #{basic_conv2d.1} parent=0
    _
  %s7 = ssub.s32 1, %s5
  %s8 = scalar_select 0, %s7, %s5
  $region1: #{basic_conv2d.1} parent=0
    #allocation2 [shape = 'u8[8192]{0}', space=vmem, size = 0x2000, scoped, tag = 'input window, operand 0']
    #allocation3 [shape = 's32[2]{0}', space=sflag, size = 0x8, scoped, tag = 'scoped memory for basic_conv2d.1']
    #allocation4 [shape = 's32[2]{0}', space=sflag, size = 0x8, scoped, tag = 'scoped memory for basic_conv2d.1']
    #allocation5 [shape = 'u8[4096]{0}', space=vmem, size = 0x1000, scoped, tag = 'input window, operand 1, single buffered']
    #allocation6 [shape = 's32[1]{0}', space=sflag, size = 0x4, scoped, tag = 'scoped memory for basic_conv2d.1']
    #allocation7 [shape = 'u8[4096]{0}', space=vmem, size = 0x1000, scoped, tag = 'input window, operand 2, single buffered']
    #allocation8 [shape = 'u8[4096]{0}', space=vmem, size = 0x1000, scoped, tag = 'input window, operand 3, single buffered']
    #allocation9 [shape = 's32[1]{0}', space=sflag, size = 0x4, scoped, tag = 'scoped memory for basic_conv2d.1']
    #allocation10 [shape = 'u8[16384]{0}', space=vmem, size = 0x4000, scoped, tag = 'output window, operand 0']
    %9 = vsyncpa [#allocation3], 0
    %s10 = scalar_lea.sflag [#allocation3], 1
    %11 = vsyncpa %s10, 0
    %12 = vsyncpa [#allocation6], 0
    %13 = vsyncpa [#allocation9], 0
    %14 = vsyncpa [#allocation4], 0
    %s15 = scalar_lea.sflag [#allocation4], 1
    %16 = vsyncpa %s15, 0
    loop: start=0, step=1, limit=4
    $region2: #{basic_conv2d.1} parent=1 // loop_pre_header
      _
    $region3: #{basic_conv2d.1} parent=1 // loop_header
      %s18 = sphi 0, %s22
      %p19 = scmp.ge.s32.totalorder %s18, 4
      %s25 = sphi 0, %s44
      %s26 = sphi 0, %s40
      %s27 = sphi 0, %s36
      %s28 = sphi 0, %s25
      %s29 = sphi 0, %s26
      %s30 = sphi 0, %s27
      %s31 = sphi 0, %s28
      %s32 = sphi 0, %s29
      %s33 = sphi 0, %s30
      %s49 = sphi 0, %s51
      %s52 = sphi 0, %s49
      %s53 = sphi 0, %s52
      %s69 = sphi 0, %s53
      %s75 = sphi 0, %s77
      %s78 = sphi 0, %s75
      %s79 = sphi 0, %s78
      %s95 = sphi 0, %s79
      %s101 = sphi 0, %s103
      %s104 = sphi 0, %s101
      %s105 = sphi 0, %s104
      %s121 = sphi 0, %s105
      %s127 = sphi 0, %s129
      %s130 = sphi 0, %s127
      %s131 = sphi 0, %s130
      %s147 = sphi 0, %s131
      %s157 = sphi 0, %s159
      %s160 = sphi 0, %s157
      %s161 = sphi 0, %s160
      %s177 = sphi 0, %s161
    $region4: #{basic_conv2d.1} parent=1 // loop_header_branch
      %21 = sbr.rel (%p19) target = $region8
    $region5: #{basic_conv2d.1} parent=1 // loop_body
      %s23 = ssub.s32 %s18, 1
      %s24 = ssub.s32 %s18, 2
      %s34 = sadd.s32 1, %s27
      %p35 = scmp.ge.s32.totalorder %s34, 1
      %s36 = scalar_select %p35, 0, %s34
      %s37 = sadd.s32 1, %s26
      %s38 = scalar_select %p35, %s37, %s26
      %p39 = scmp.ge.s32.totalorder %s38, 1
      %s40 = scalar_select %p39, 0, %s38
      %s41 = sadd.s32 1, %s25
      %s42 = scalar_select %p39, %s41, %s25
      %p43 = scmp.ge.s32.totalorder %s42, 2
      %s44 = scalar_select %p43, 0, %s42
      %s45 = ssub.s32 %s25, %s44
      %s46 = ssub.s32 %s26, %s40
      %s47 = sor.u32 %s45, %s46
      %p48 = scmp.eq.s32.totalorder %s47, 0
      %s50 = sadd.s32 %s49, 1
      %s51 = scalar_select %p48, %s49, %s50
      %p54 = pneg %p48
      %p55 = scmp.eq.s32.totalorder %s18, 1
      %p56 = por %p54, %p55
      %p57 = scmp.ne.s32.totalorder %s49, %s52
      %p58 = scmp.eq.s32.totalorder %s18, 0
      %p59 = por %p57, %p58
      %p60 = scmp.ne.s32.totalorder %s49, %s52
      %p61 = scmp.eq.s32.totalorder %s23, 1
      %p62 = por %p60, %p61
      %p63 = scmp.ne.s32.totalorder %s52, %s53
      %p64 = scmp.eq.s32.totalorder %s23, 0
      %p65 = por %p63, %p64
      %p66 = scmp.ne.s32.totalorder %s52, %s53
      %p67 = scmp.eq.s32.totalorder %s24, 1
      %p68 = por %p66, %p67
      %p70 = scmp.ne.s32.totalorder %s53, %s69
      %p71 = scmp.eq.s32.totalorder %s24, 0
      %p72 = por %p70, %p71
      %s73 = ssub.s32 %s27, %s36
      %p74 = scmp.eq.s32.totalorder %s73, 0
      %s76 = sadd.s32 %s75, 1
      %s77 = scalar_select %p74, %s75, %s76
      %p80 = pneg %p74
      %p81 = scmp.eq.s32.totalorder %s18, 1
      %p82 = por %p80, %p81
      %p83 = scmp.ne.s32.totalorder %s75, %s78
      %p84 = scmp.eq.s32.totalorder %s18, 0
      %p85 = por %p83, %p84
      %p86 = scmp.ne.s32.totalorder %s75, %s78
      %p87 = scmp.eq.s32.totalorder %s23, 1
      %p88 = por %p86, %p87
      %p89 = scmp.ne.s32.totalorder %s78, %s79
      %p90 = scmp.eq.s32.totalorder %s23, 0
      %p91 = por %p89, %p90
      %p92 = scmp.ne.s32.totalorder %s78, %s79
      %p93 = scmp.eq.s32.totalorder %s24, 1
      %p94 = por %p92, %p93
      %p96 = scmp.ne.s32.totalorder %s79, %s95
      %p97 = scmp.eq.s32.totalorder %s24, 0
      %p98 = por %p96, %p97
      %s99 = ssub.s32 %s27, %s36
      %p100 = scmp.eq.s32.totalorder %s99, 0
      %s102 = sadd.s32 %s101, 1
      %s103 = scalar_select %p100, %s101, %s102
      %p106 = pneg %p100
      %p107 = scmp.eq.s32.totalorder %s18, 1
      %p108 = por %p106, %p107
      %p109 = scmp.ne.s32.totalorder %s101, %s104
      %p110 = scmp.eq.s32.totalorder %s18, 0
      %p111 = por %p109, %p110
      %p112 = scmp.ne.s32.totalorder %s101, %s104
      %p113 = scmp.eq.s32.totalorder %s23, 1
      %p114 = por %p112, %p113
      %p115 = scmp.ne.s32.totalorder %s104, %s105
      %p116 = scmp.eq.s32.totalorder %s23, 0
      %p117 = por %p115, %p116
      %p118 = scmp.ne.s32.totalorder %s104, %s105
      %p119 = scmp.eq.s32.totalorder %s24, 1
      %p120 = por %p118, %p119
      %p122 = scmp.ne.s32.totalorder %s105, %s121
      %p123 = scmp.eq.s32.totalorder %s24, 0
      %p124 = por %p122, %p123
      %s125 = ssub.s32 %s27, %s36
      %p126 = scmp.eq.s32.totalorder %s125, 0
      %s128 = sadd.s32 %s127, 1
      %s129 = scalar_select %p126, %s127, %s128
      %p132 = pneg %p126
      %p133 = scmp.eq.s32.totalorder %s18, 1
      %p134 = por %p132, %p133
      %p135 = scmp.ne.s32.totalorder %s127, %s130
      %p136 = scmp.eq.s32.totalorder %s18, 0
      %p137 = por %p135, %p136
      %p138 = scmp.ne.s32.totalorder %s127, %s130
      %p139 = scmp.eq.s32.totalorder %s23, 1
      %p140 = por %p138, %p139
      %p141 = scmp.ne.s32.totalorder %s130, %s131
      %p142 = scmp.eq.s32.totalorder %s23, 0
      %p143 = por %p141, %p142
      %p144 = scmp.ne.s32.totalorder %s130, %s131
      %p145 = scmp.eq.s32.totalorder %s24, 1
      %p146 = por %p144, %p145
      %p148 = scmp.ne.s32.totalorder %s131, %s147
      %p149 = scmp.eq.s32.totalorder %s24, 0
      %p150 = por %p148, %p149
      %s151 = ssub.s32 %s25, %s44
      %s152 = ssub.s32 %s27, %s36
      %s153 = sor.u32 %s151, %s152
      %s154 = ssub.s32 %s26, %s40
      %s155 = sor.u32 %s153, %s154
      %p156 = scmp.eq.s32.totalorder %s155, 0
      %s158 = sadd.s32 %s157, 1
      %s159 = scalar_select %p156, %s157, %s158
      %p162 = pneg %p156
      %p163 = scmp.eq.s32.totalorder %s18, 1
      %p164 = por %p162, %p163
      %p165 = scmp.ne.s32.totalorder %s157, %s160
      %p166 = scmp.eq.s32.totalorder %s18, 0
      %p167 = por %p165, %p166
      %p168 = scmp.ne.s32.totalorder %s157, %s160
      %p169 = scmp.eq.s32.totalorder %s23, 1
      %p170 = por %p168, %p169
      %p171 = scmp.ne.s32.totalorder %s160, %s161
      %p172 = scmp.eq.s32.totalorder %s23, 0
      %p173 = por %p171, %p172
      %p174 = scmp.ne.s32.totalorder %s160, %s161
      %p175 = scmp.eq.s32.totalorder %s24, 1
      %p176 = por %p174, %p175
      %p178 = scmp.ne.s32.totalorder %s161, %s177
      %p179 = scmp.eq.s32.totalorder %s24, 0
      %p180 = por %p178, %p179
      %p181 = scmp.le.s32.totalorder 1, %s18
      %p182 = scmp.lt.s32.totalorder %s18, 3
      %p183 = pnand %p181, %p182
      %p184 = pneg %p183
      // Predicated region
      $region9: #{basic_conv2d.1} parent=5 // pred_check
        _
      $region10: #{basic_conv2d.1} parent=5 // pred_check_branch
        %186 = sbr.rel (%p183) target = $region12
      $region11: #{basic_conv2d.1} parent=5 // pred_region
        %s187 = ssub.s32 %s18, 1
        // Predicated region
        $region13: #{basic_conv2d.1} parent=11 // pred_check
          %p188 = pneg %p91
        $region14: #{basic_conv2d.1} parent=11 // pred_check_branch
          %190 = sbr.rel (%p188) target = $region16
        $region15: #{basic_conv2d.1} parent=11 // pred_region
          %s192 = ssub.s32 128, 128
          %193 = vsyncadd [#allocation6], %s192
          %s194 = smul.addr %s30, 128
          %s195 = scalar_lea.hbm %s1, %s194
          %s197 = sshll.u32 [#allocation5], 4
          %s198 = int_to_ptr.vmem [resolvable:$true] %s197
          %200 = dma.hbm_to_vmem [thread:$0]  %s195, 128, %s198, [#allocation6]
        $region16: #{basic_conv2d.1} parent=11 // pred_fallthru
          _
        // Predicated region
        $region17: #{basic_conv2d.1} parent=11 // pred_check
          %p201 = pneg %p117
        $region18: #{basic_conv2d.1} parent=11 // pred_check_branch
          %203 = sbr.rel (%p201) target = $region20
        $region19: #{basic_conv2d.1} parent=11 // pred_region
          %s205 = ssub.s32 128, 128
          %206 = vsyncadd [#allocation6], %s205
          %s207 = smul.addr %s30, 128
          %s208 = scalar_lea.hbm %s2, %s207
          %s210 = sshll.u32 [#allocation7], 4
          %s211 = int_to_ptr.vmem [resolvable:$true] %s210
          %213 = dma.hbm_to_vmem [thread:$0]  %s208, 128, %s211, [#allocation6]
        $region20: #{basic_conv2d.1} parent=11 // pred_fallthru
          _
        // Predicated region
        $region21: #{basic_conv2d.1} parent=11 // pred_check
          %p214 = pneg %p143
        $region22: #{basic_conv2d.1} parent=11 // pred_check_branch
          %216 = sbr.rel (%p214) target = $region24
        $region23: #{basic_conv2d.1} parent=11 // pred_region
          %s218 = ssub.s32 128, 128
          %219 = vsyncadd [#allocation9], %s218
          %s220 = smul.addr %s30, 128
          %s221 = scalar_lea.hbm %s3, %s220
          %s223 = sshll.u32 [#allocation8], 4
          %s224 = int_to_ptr.vmem [resolvable:$true] %s223
          %226 = dma.hbm_to_vmem [thread:$0]  %s221, 128, %s224, [#allocation9]
        $region24: #{basic_conv2d.1} parent=11 // pred_fallthru
          _
      $region12: #{basic_conv2d.1} parent=5 // pred_fallthru
        _
      %p227 = scmp.lt.s32.totalorder %s18, 2
      // Predicated region
      $region25: #{basic_conv2d.1} parent=5 // pred_check
        %p228 = pneg %p227
      $region26: #{basic_conv2d.1} parent=5 // pred_check_branch
        %230 = sbr.rel (%p228) target = $region28
      $region27: #{basic_conv2d.1} parent=5 // pred_region
        // Predicated region
        $region29: #{basic_conv2d.1} parent=27 // pred_check
          %p231 = pneg %p59
        $region30: #{basic_conv2d.1} parent=27 // pred_check_branch
          %233 = sbr.rel (%p231) target = $region32
        $region31: #{basic_conv2d.1} parent=27 // pred_region
          %s234 = sand.u32 %s49, 1
          %s235 = scalar_lea.sflag [#allocation3], %s234
          %s236 = sand.u32 %s49, 1
          %s237 = smul.addr %s236, 8
          %s238 = scalar_lea.vmem [#allocation2], %s237
          %s239 = smul.u32 2, %s26
          %s241 = ssub.s32 128, 128
          %242 = vsyncadd %s235, %s241
          %s243 = smul.addr %s25, 2
          %s244 = sadd.s32 %s239, %s243
          %s245 = smul.addr %s244, 64
          %s246 = scalar_lea.hbm %s0, %s245
          %s248 = sshll.u32 %s238, 4
          %s249 = int_to_ptr.vmem [resolvable:$true] %s248
          %251 = dma.hbm_to_vmem [thread:$0]  %s246, 128, %s249, %s235
        $region32: #{basic_conv2d.1} parent=27 // pred_fallthru
          _
      $region28: #{basic_conv2d.1} parent=5 // pred_fallthru
        _
      %p252 = scmp.le.s32.totalorder 1, %s18
      %p253 = scmp.lt.s32.totalorder %s18, 3
      %p254 = pnand %p252, %p253
      %p255 = pneg %p254
      // Predicated region
      $region33: #{basic_conv2d.1} parent=5 // pred_check
        _
      $region34: #{basic_conv2d.1} parent=5 // pred_check_branch
        %257 = sbr.rel (%p254) target = $region36
      $region35: #{basic_conv2d.1} parent=5 // pred_region
        %s258 = ssub.s32 %s18, 1
        %s259 = sand.u32 %s52, 1
        %s260 = scalar_lea.sflag [#allocation3], %s259
        %s261 = sand.u32 %s52, 1
        %s262 = smul.addr %s261, 8
        %s263 = scalar_lea.vmem [#allocation2], %s262
        // Predicated region
        $region37: #{basic_conv2d.1} parent=35 // pred_check
          %p264 = pneg %p65
        $region38: #{basic_conv2d.1} parent=35 // pred_check_branch
          %266 = sbr.rel (%p264) target = $region40
        $region39: #{basic_conv2d.1} parent=35 // pred_region
          %267 = dma.done %s260, 128
        $region40: #{basic_conv2d.1} parent=35 // pred_fallthru
          _
        // Predicated region
        $region41: #{basic_conv2d.1} parent=35 // pred_check
          %p268 = pneg %p91
        $region42: #{basic_conv2d.1} parent=35 // pred_check_branch
          %270 = sbr.rel (%p268) target = $region44
        $region43: #{basic_conv2d.1} parent=35 // pred_region
          %271 = dma.done [#allocation6], 128
        $region44: #{basic_conv2d.1} parent=35 // pred_fallthru
          _
        // Predicated region
        $region45: #{basic_conv2d.1} parent=35 // pred_check
          %p272 = pneg %p117
        $region46: #{basic_conv2d.1} parent=35 // pred_check_branch
          %274 = sbr.rel (%p272) target = $region48
        $region47: #{basic_conv2d.1} parent=35 // pred_region
          %275 = dma.done [#allocation6], 128
        $region48: #{basic_conv2d.1} parent=35 // pred_fallthru
          _
        // Predicated region
        $region49: #{basic_conv2d.1} parent=35 // pred_check
          %p276 = pneg %p143
        $region50: #{basic_conv2d.1} parent=35 // pred_check_branch
          %278 = sbr.rel (%p276) target = $region52
        $region51: #{basic_conv2d.1} parent=35 // pred_region
          %279 = dma.done [#allocation9], 128
        $region52: #{basic_conv2d.1} parent=35 // pred_fallthru
          _
        %s280 = sand.u32 %s52, 1
        %s281 = scalar_lea.sflag [#allocation3], %s280
        %s282 = sand.u32 %s52, 1
        %s283 = smul.addr %s282, 8
        %s284 = scalar_lea.vmem [#allocation2], %s283
        %p285 = pneg %p65
        %p286 = pneg %p62
        %p287 = pneg %p91
        %p288 = pneg %p88
        %p289 = pneg %p117
        %p290 = pneg %p114
        %p291 = pneg %p143
        %p292 = pneg %p140
        %p293 = pneg %p173
        %p294 = pneg %p170
        %s295 = sand.u32 %s160, 1
        %s296 = scalar_lea.sflag [#allocation4], %s295
        %s297 = sand.u32 %s160, 1
        %s298 = smul.addr %s297, 16
        %s299 = scalar_lea.vmem [#allocation10], %s298
        %s300 = smul.u32 2, %s29
        %s301 = smul.u32 2, %s29
        %v302 = vld [vmem:[#allocation5] sm:$0xff]
        %v303 = vld [vmem:[%s263] sm:$0xff]
        %v305 = vcombine.high %v303, %v303
        %vm306 = vcmask 31744
        %v308 = vsel %vm306, %v302, 0
        %vm310 = vcmask 1043456
        %v311 = vsel %vm310, %v303, 0
        %v313 = vsel %vm310, %v305, 0
        %315 = vmatprep.subr.mxu0 %v313
        %316 = vmatpush1.msra.mxu0 %v311
        %317 = vmatprep.subr.mxu0 0.0
        %318 = vmatpush1.msra.mxu0 0.0
        %319 = vmatprep.subr.mxu0 0.0
        %320 = vmatpush1.msra.mxu0 0.0
        %321 = vmatprep.subr.mxu0 0.0
        %322 = vmatpush1.msra.mxu0 0.0
        %323 = vmatprep.subr.mxu0 0.0
        %324 = vmatpush1.msra.mxu0 0.0
        %325 = vmatprep.subr.mxu0 0.0
        %326 = vmatpush1.msra.mxu0 0.0
        %327 = vmatprep.subr.mxu0 0.0
        %328 = vmatpush1.msra.mxu0 0.0
        %329 = vmatprep.subr.mxu0 0.0
        %330 = vmatpush1.msra.mxu0 0.0
        %331 = vmatprep.subr.mxu0 0.0
        %332 = vmatpush1.msra.mxu0 0.0
        %333 = vmatprep.subr.mxu0 0.0
        %334 = vmatpush1.msra.mxu0 0.0
        %335 = vmatprep.subr.mxu0 0.0
        %336 = vmatpush1.msra.mxu0 0.0
        %337 = vmatprep.subr.mxu0 0.0
        %338 = vmatpush1.msra.mxu0 0.0
        %339 = vmatprep.subr.mxu0 0.0
        %340 = vmatpush1.msra.mxu0 0.0
        %341 = vmatprep.subr.mxu0 0.0
        %342 = vmatpush1.msra.mxu0 0.0
        %343 = vmatprep.subr.mxu0 0.0
        %344 = vmatpush1.msra.mxu0 0.0
        %345 = vmatprep.subr.mxu0 0.0
        %346 = vmatpush1.msra.mxu0 0.0
        %347 = vmatprep.subr.mxu0 0.0
        %348 = vmatpush1.msra.mxu0 0.0
        %349 = vmatprep.subr.mxu0 0.0
        %350 = vmatpush1.msra.mxu0 0.0
        %351 = vmatprep.subr.mxu0 0.0
        %352 = vmatpush1.msra.mxu0 0.0
        %353 = vmatprep.subr.mxu0 0.0
        %354 = vmatpush1.msra.mxu0 0.0
        %355 = vmatprep.subr.mxu0 0.0
        %356 = vmatpush1.msra.mxu0 0.0
        %357 = vmatprep.subr.mxu0 0.0
        %358 = vmatpush1.msra.mxu0 0.0
        %359 = vmatprep.subr.mxu0 0.0
        %360 = vmatpush1.msra.mxu0 0.0
        %361 = vmatprep.subr.mxu0 0.0
        %362 = vmatpush1.msra.mxu0 0.0
        %363 = vmatprep.subr.mxu0 0.0
        %364 = vmatpush1.msra.mxu0 0.0
        %365 = vmatprep.subr.mxu0 0.0
        %366 = vmatpush1.msra.mxu0 0.0
        %367 = vmatprep.subr.mxu0 0.0
        %368 = vmatpush1.msra.mxu0 0.0
        %369 = vmatprep.subr.mxu0 0.0
        %370 = vmatpush1.msra.mxu0 0.0
        %371 = vmatprep.subr.mxu0 0.0
        %372 = vmatpush1.msra.mxu0 0.0
        %373 = vmatprep.subr.mxu0 0.0
        %374 = vmatpush1.msra.mxu0 0.0
        %375 = vmatprep.subr.mxu0 0.0
        %376 = vmatpush1.msra.mxu0 0.0
        %377 = vmatprep.subr.mxu0 0.0
        %378 = vmatpush1.msra.mxu0 0.0
        %379 = vmatprep.mubr.f32.mxu0 0.0
        %380 = vmatmul.mubr.f32.gmra.mrb[0].mxu0 %v308
        %v381 = vpop.f32.mrb[0].mxu0
        %v382 = vadd.f32 0.0, %v381
        %v383 = vpop.f32.mrb[0].mxu0
        %v384 = vadd.f32 0.0, %v383
        %385 = vdwg.mxu0
        %v386 = vld [vmem:[#allocation7] sm:$0xff]
        %388 = vset.pattern.permute.xlu0 0
        %389 = vperm.xlu0 %388, %v386
        %v390 = vpop.permute.xlu0 %389
        %v392 = vmul.f32 %v382, %v390
        %v393 = vmul.f32 %v384, %v390
        %v394 = vld [vmem:[#allocation8] sm:$0xff]
        %396 = vset.pattern.permute.xlu0 0
        %397 = vperm.xlu0 %396, %v394
        %v398 = vpop.permute.xlu0 %397
        %v400 = vadd.f32 %v392, %v398
        %v401 = vadd.f32 %v393, %v398
        %v402 = vmax.f32 %v400, 0.0
        %v403 = vmax.f32 %v401, 0.0
        %404 = vst [vmem:[%s299] sm:$0xff] %v402
        %405 = vst [vmem:[%s299 + $0x8] sm:$0xff] %v403
        %s406 = sand.u32 %s160, 1
        %s407 = scalar_lea.sflag [#allocation4], %s406
        %s408 = sand.u32 %s160, 1
        %s409 = smul.addr %s408, 16
        %s410 = scalar_lea.vmem [#allocation10], %s409
        // Predicated region
        $region53: #{basic_conv2d.1} parent=35 // pred_check
          %p411 = pneg %p170
        $region54: #{basic_conv2d.1} parent=35 // pred_check_branch
          %413 = sbr.rel (%p411) target = $region56
        $region55: #{basic_conv2d.1} parent=35 // pred_region
          %s414 = smul.u32 2, %s29
          %s416 = ssub.s32 256, 256
          %417 = vsyncadd %s407, %s416
          %s418 = smul.addr %s30, 2
          %s419 = sadd.s32 %s414, %s418
          %s420 = smul.addr %s28, 2
          %s421 = sadd.s32 %s419, %s420
          %s422 = smul.addr %s421, 128
          %s423 = scalar_lea.hbm %s4, %s422
          %s425 = sshll.u32 %s410, 4
          %s426 = int_to_ptr.vmem [resolvable:$true] %s425
          %428 = dma.vmem_to_hbm [thread:$0]  %s426, 256, %s423, %s407
        $region56: #{basic_conv2d.1} parent=35 // pred_fallthru
          _
      $region36: #{basic_conv2d.1} parent=5 // pred_fallthru
        _
      %p429 = scmp.le.s32.totalorder 2, %s18
      // Predicated region
      $region57: #{basic_conv2d.1} parent=5 // pred_check
        %p430 = pneg %p429
      $region58: #{basic_conv2d.1} parent=5 // pred_check_branch
        %432 = sbr.rel (%p430) target = $region60
      $region59: #{basic_conv2d.1} parent=5 // pred_region
        %s433 = ssub.s32 %s18, 2
        // Predicated region
        $region61: #{basic_conv2d.1} parent=59 // pred_check
          %p434 = pneg %p176
        $region62: #{basic_conv2d.1} parent=59 // pred_check_branch
          %436 = sbr.rel (%p434) target = $region64
        $region63: #{basic_conv2d.1} parent=59 // pred_region
          %s437 = sand.u32 %s161, 1
          %s438 = scalar_lea.sflag [#allocation4], %s437
          %s439 = sand.u32 %s161, 1
          %s440 = smul.addr %s439, 16
          %s441 = scalar_lea.vmem [#allocation10], %s440
          %442 = dma.done %s438, 256
        $region64: #{basic_conv2d.1} parent=59 // pred_fallthru
          _
      $region60: #{basic_conv2d.1} parent=5 // pred_fallthru
        _
    $region6: #{basic_conv2d.1} parent=1 // loop_footer
      %s22 = sadd.s32 1, %s18
    $region7: #{basic_conv2d.1} parent=1 // loop_footer_branch
      %17 = sbr.rel target = $region3
    $region8: #{basic_conv2d.1} parent=1 // loop_exit
      _
    %443 = vsyncpa [#allocation3], 1
    %s444 = scalar_lea.sflag [#allocation3], 1
    %445 = vsyncpa %s444, 1
    %446 = vsyncpa [#allocation6], 1
    %447 = vsyncpa [#allocation9], 1
    %448 = vsyncpa [#allocation4], 1
    %s449 = scalar_lea.sflag [#allocation4], 1
    %450 = vsyncpa %s449, 1

</llo_original>
